<compile_context>
chip_gen: v5e
topology: v5e:2x2
jax: 0.10.0
libtpu: 0.0.40
codegen_flags: <defaults>
</compile_context>

<pallas_src>
import math

import jax
import jax.numpy as jnp
from jax.experimental import pallas as pl
from jax.experimental.pallas import tpu as pltpu


# ----------------------------------------------------------------------------
# Parameter construction (plain-JAX glue; mirrors create_2d_positional_embedding)
# ----------------------------------------------------------------------------
def create_2d_positional_embedding(img_height, img_width, d_model):
    assert d_model % 2 == 0, "d_model should be even"
    y_pos, x_pos = jnp.meshgrid(
        jnp.arange(img_height), jnp.arange(img_width), indexing="ij"
    )
    y_pos = y_pos.flatten().astype(jnp.float32)
    x_pos = x_pos.flatten().astype(jnp.float32)
    # Exact reproduction of the PyTorch math (incl. 0/0 -> NaN when a size == 1).
    y_pos = y_pos / (img_height - 1) * 2 - 1
    x_pos = x_pos / (img_width - 1) * 2 - 1
    div_term = jnp.exp(
        jnp.arange(0, d_model // 2).astype(jnp.float32)
        * (-math.log(10000.0) / (d_model / 2))
    )
    pos_y = jnp.outer(y_pos, div_term).reshape(img_height * img_width, -1)
    pos_x = jnp.outer(x_pos, div_term).reshape(img_height * img_width, -1)
    pos_encoding = jnp.zeros((img_height * img_width, d_model), jnp.float32)
    pos_encoding = pos_encoding.at[:, 0::2].set(jnp.sin(pos_y))
    pos_encoding = pos_encoding.at[:, 1::2].set(jnp.cos(pos_x))
    return pos_encoding.reshape(img_height, img_width, d_model)


def init_time_series_pos_embedding(seq_len, d_model):
    """Deterministic parameter init, matching the nn.Module __init__."""
    pe = create_2d_positional_embedding(1, seq_len, d_model)  # (1, T, D)
    pe = pe[:, :, None, None, :]                              # (1, T, 1, 1, D)
    return jnp.flip(pe, axis=1)                               # .flip(1)


def prepare_pos_rows(pos_param, img_height, img_width, dtype=jnp.float32):
    """(1, T, 1, 1, D) -> (T, H*W*D) broadcast rows.

    Cheap (T*H*W*D elements) but it does touch HBM, so call it ONCE per
    parameter update, NOT once per forward call (per-call it would add ~1/B of
    the x HBM traffic).
    """
    _, T, _, _, D = pos_param.shape
    HW = img_height * img_width
    pos = pos_param.reshape(T, 1, D).astype(dtype)
    return jnp.broadcast_to(pos, (T, HW, D)).reshape(T, HW * D)


# ----------------------------------------------------------------------------
# Tile selection (footprint-aware)
# ----------------------------------------------------------------------------
def _vmem_capacity_bytes():
    """Physical VMEM per TensorCore (128 MiB v5e/v6e, 64 MiB v7x)."""
    try:
        cap = int(pltpu.get_tpu_info().vmem_capacity_bytes)
        if cap > 0:
            return cap
    except Exception:
        pass
    return 64 << 20  # conservative fallback (smallest across generations)


def _sublane_pack(dtype):
    # Rows per vreg sublane group: 8 for 4-byte, 16 for 2-byte, 32 for 1-byte.
    return max(8, 32 // jnp.dtype(dtype).itemsize)


def _round_up(x, m):
    return ((x + m - 1) // m) * m


def _divisors(n):
    out = set()
    i = 1
    while i * i <= n:
        if n % i == 0:
            out.add(i)
            out.add(n // i)
        i += 1
    return sorted(out)


def _footprint_bytes(bb, tb, cb, itemsize, sub):
    """Physical VMEM for one pipeline stage set (padded, double-buffered)."""
    rows = _round_up(tb, sub)
    cols = _round_up(cb, 128)
    x_tile = bb * rows * cols * itemsize     # one x (or out) buffer
    pos_tile = rows * cols * itemsize        # one pos buffer
    # 2x input + 2x output + 2x pos (Pallas double-buffers every operand).
    return 4 * x_tile + 2 * pos_tile


def _select_tiles(B, T, C, dtype, budget_bytes):
    """Pick (bb, tb, cb): prefer full T, then the largest lane-dense column
    block, then the largest batch block that keeps the padded, double-buffered
    footprint under budget."""
    itemsize = jnp.dtype(dtype).itemsize
    sub = _sublane_pack(dtype)

    if C % 128 == 0:
        col_cands = [c for c in _divisors(C) if c % 128 == 0]
    else:
        col_cands = [C]  # full-extent column block is always legal

    t_divs = _divisors(T)
    t_cands = (
        [T]
        + sorted([t for t in t_divs if t != T and t % sub == 0], reverse=True)
        + sorted([t for t in t_divs if t != T and t % sub != 0], reverse=True)
    )
    b_cands = sorted(_divisors(B), reverse=True)

    for tb in t_cands:
        for cb in sorted(col_cands, reverse=True):
            for bb in b_cands:
                if _footprint_bytes(bb, tb, cb, itemsize, sub) <= budget_bytes:
                    return bb, tb, cb
    # Degenerate budget: fall back to the minimal legal tile.
    return 1, t_cands[-1], min(col_cands)


# ----------------------------------------------------------------------------
# Pallas kernel: lane-dense broadcast add
# ----------------------------------------------------------------------------
def _add_pos_kernel(x_ref, pos_ref, o_ref):
    # x_ref / o_ref: (bb, tb, cb); pos_ref: (tb, cb) -> broadcast over batch dim
    # (leading-dim broadcast; VPU work is free, the kernel is DMA-bound).
    o_ref[...] = x_ref[...] + pos_ref[...]


def time_series_pos_embedding(x, pos_rows):
    """Hot-path forward: x (B, T, H, W, D) + cached pos_rows (T, H*W*D)."""
    B, T, H, W, D = x.shape
    C = H * W * D
    assert pos_rows.shape == (T, C), (pos_rows.shape, (T, C))
    pos_rows = pos_rows.astype(x.dtype)

    x3 = x.reshape(B, T, C)

    itemsize = jnp.dtype(x.dtype).itemsize
    sub = _sublane_pack(x.dtype)

    cap = _vmem_capacity_bytes()
    budget = min((cap * 3) // 4, 48 << 20)           # pipeline footprint budget
    bb, tb, cb = _select_tiles(B, T, C, x.dtype, budget)
    footprint = _footprint_bytes(bb, tb, cb, itemsize, sub)

    # Scoped VMEM limit: at least the real footprint (+slack), never above
    # physical (fixes v5e's 16 MiB default; keeps v7x under 64 MiB physical).
    vmem_limit = int(min(cap - (4 << 20), max(32 << 20, footprint + (8 << 20))))
    vmem_limit = int(max(vmem_limit, footprint + (2 << 20)))

    # Columns OUTER, batch INNER: the pos block index (t, j) is constant across
    # the innermost (batch) axis, so Pallas skips redundant pos DMAs.
    grid = (C // cb, T // tb, B // bb)

    out = pl.pallas_call(
        _add_pos_kernel,
        out_shape=jax.ShapeDtypeStruct((B, T, C), x.dtype),
        grid=grid,
        in_specs=[
            pl.BlockSpec((bb, tb, cb), lambda j, t, b: (b, t, j)),
            pl.BlockSpec((tb, cb), lambda j, t, b: (t, j)),
        ],
        out_specs=pl.BlockSpec((bb, tb, cb), lambda j, t, b: (b, t, j)),
        input_output_aliases={0: 0},  # y = x + pos -> write in place over x
        compiler_params=pltpu.CompilerParams(
            dimension_semantics=("parallel", "parallel", "parallel"),
            vmem_limit_bytes=vmem_limit,
        ),
    )(x3, pos_rows)
    return out.reshape(B, T, H, W, D)


def time_series_pos_embedding_from_param(x, pos_param):
    """Convenience wrapper matching the nn.Module forward signature.
    (Prefer caching prepare_pos_rows() per parameter update in a real model.)"""
    _, _, H, W, _ = x.shape
    return time_series_pos_embedding(x, prepare_pos_rows(pos_param, H, W, x.dtype))


# ----------------------------------------------------------------------------
# Demo / self-check
# ----------------------------------------------------------------------------
if __name__ == "__main__":
    B, T, H, W, D = 2, 8, 4, 4, 32  # seq_len=8, d_model=32

    key = jax.random.PRNGKey(0)
    x = jax.random.normal(key, (B, T, H, W, D), dtype=jnp.float32)

    pos_param = init_time_series_pos_embedding(seq_len=T, d_model=D)

    # Reference (same semantics as the PyTorch forward), computed before the
    # kernel call so the aliased output cannot interfere.
    ref = jax.block_until_ready(x + pos_param)

    # Broadcast rows cached once (outside the hot path), then the kernel.
    pos_rows = jax.block_until_ready(prepare_pos_rows(pos_param, H, W, x.dtype))
    out = jax.block_until_ready(time_series_pos_embedding(x, pos_rows))

    assert out.shape == (B, T, H, W, D)
    assert jnp.allclose(out, ref, atol=1e-6, equal_nan=True)

    print("KERNEL_OK")
</pallas_src>

<mosaic_0001>
module attributes {stable_mosaic.version = 11 : i64} {
  func.func @_add_pos_kernel(%arg0: i32, %arg1: i32, %arg2: i32, %arg3: memref<2x8x512xf32, #tpu.memory_space<vmem>>, %arg4: memref<8x512xf32, #tpu.memory_space<vmem>>, %arg5: memref<2x8x512xf32, #tpu.memory_space<vmem>>) attributes {dimension_semantics = [#tpu.dimension_semantics<parallel>, #tpu.dimension_semantics<parallel>, #tpu.dimension_semantics<parallel>], iteration_bounds = array<i64: 1, 1, 1>, scalar_prefetch = 0 : i64, scratch_operands = 0 : i64, tpu.core_type = #tpu.core_type<tc>, window_params = [{transform_indices = @transform_0, window_bounds = array<i64: 2, 8, 512>}, {transform_indices = @transform_1, window_bounds = array<i64: 8, 512>}, {transform_indices = @transform_2, window_bounds = array<i64: 2, 8, 512>}]} {
    %c0 = arith.constant 0 : index
    %c0_0 = arith.constant 0 : index
    %c0_1 = arith.constant 0 : index
    %0 = vector.load %arg3[%c0, %c0_0, %c0_1] : memref<2x8x512xf32, #tpu.memory_space<vmem>>, vector<2x8x512xf32>
    %c0_2 = arith.constant 0 : index
    %c0_3 = arith.constant 0 : index
    %1 = vector.load %arg4[%c0_2, %c0_3] : memref<8x512xf32, #tpu.memory_space<vmem>>, vector<8x512xf32>
    %2 = vector.shape_cast %1 : vector<8x512xf32> to vector<1x8x512xf32>
    %3 = vector.broadcast %2 : vector<1x8x512xf32> to vector<2x8x512xf32>
    %4 = arith.addf %0, %3 : vector<2x8x512xf32>
    %c0_4 = arith.constant 0 : index
    %c0_5 = arith.constant 0 : index
    %c0_6 = arith.constant 0 : index
    %5 = vector.load %arg5[%c0_4, %c0_5, %c0_6] : memref<2x8x512xf32, #tpu.memory_space<vmem>>, vector<2x8x512xf32>
    tpu.vector_store %arg5[%c0_4, %c0_5, %c0_6], %4 {strides = array<i32>} : memref<2x8x512xf32, #tpu.memory_space<vmem>>, vector<2x8x512xf32>,
    return
  }
  func.func @transform_0(%arg0: i32, %arg1: i32, %arg2: i32) -> (i32, i32, i32) {
    %c0_i32 = arith.constant 0 : i32
    return %arg2, %arg1, %arg0 : i32, i32, i32
  }
  func.func @transform_1(%arg0: i32, %arg1: i32, %arg2: i32) -> (i32, i32) {
    %c0_i32 = arith.constant 0 : i32
    return %arg1, %arg0 : i32, i32
  }
  func.func @transform_2(%arg0: i32, %arg1: i32, %arg2: i32) -> (i32, i32, i32) {
    %c0_i32 = arith.constant 0 : i32
    return %arg2, %arg1, %arg0 : i32, i32, i32
  }
}

</mosaic_0001>

<llo_original>
// kernel: tpu_custom_call.1
$region0: #{tpu_custom_call.1}
  #allocation0 [shape = 'u32[]', space=smem, size = 0x4, offset = 0x4, fixed_abs, tag = 'smem constant byte address 0x4 - core index']
  #allocation1 [shape = 'u32[72,128]{1,0:T(1,128)}', space=vmem, size = 0x9000, scoped, tag = 'internal scratch']
  %s0 = inlined_call_operand.hbm [shape: f32[2,8,512], index: 0, kind: input, shape index: {}, may-alias: {0,2}]
  %s1 = inlined_call_operand.vmem [shape: f32[8,512], index: 1, kind: input, shape index: {}]
  %s2 = inlined_call_operand.hbm [shape: f32[2,8,512], index: 2, kind: output, shape index: {}, may-alias: {0,2}]
  %s3 = sld [smem:[#allocation0]]
  $region22: #{tpu_custom_call.1} parent=0
    _
  %s5 = ssub.s32 1, %s3
  %s6 = scalar_select 0, %s5, %s3
  $region1: #{tpu_custom_call.1} parent=0
    #allocation2 [shape = 'u8[32768]{0}', space=vmem, size = 0x8000, scoped, tag = 'input window, operand 0, single buffered']
    #allocation3 [shape = 's32[1]{0}', space=sflag, size = 0x4, scoped, tag = 'scoped memory for tpu_custom_call.1']
    #allocation4 [shape = 's32[1]{0}', space=sflag, size = 0x4, scoped, tag = 'scoped memory for tpu_custom_call.1']
    #allocation5 [shape = 'u8[32768]{0}', space=vmem, size = 0x8000, scoped, tag = 'output window, operand 0, single buffered']
    %7 = vsyncpa [#allocation3], 0
    %8 = vsyncpa [#allocation4], 0
    // Predicated region
    $region2: #{tpu_custom_call.1} parent=1 // pred_check
      _
    $region3: #{tpu_custom_call.1} parent=1 // pred_check_branch
      %10 = sbr.rel (0) target = $region5
    $region4: #{tpu_custom_call.1} parent=1 // pred_region
      %12 = vsyncadd [#allocation3], 0
      %s13 = sshll.u32 %s0, 4
      %s14 = int_to_ptr.hbm [resolvable:$true] %s13
      %s15 = sshll.u32 [#allocation2], 4
      %s16 = int_to_ptr.vmem [resolvable:$true] %s15
      %21 = dma.hbm_to_vmem [thread:$0]  %s14, 1024, %s16, [#allocation3], 512, 512, 32
    $region5: #{tpu_custom_call.1} parent=1 // pred_fallthru
      _
    // Predicated region
    $region6: #{tpu_custom_call.1} parent=1 // pred_check
      _
    $region7: #{tpu_custom_call.1} parent=1 // pred_check_branch
      %23 = sbr.rel (0) target = $region9
    $region8: #{tpu_custom_call.1} parent=1 // pred_region
      _
    $region9: #{tpu_custom_call.1} parent=1 // pred_fallthru
      _
    // Predicated region
    $region10: #{tpu_custom_call.1} parent=1 // pred_check
      _
    $region11: #{tpu_custom_call.1} parent=1 // pred_check_branch
      %25 = sbr.rel (0) target = $region13
    $region12: #{tpu_custom_call.1} parent=1 // pred_region
      %27 = dma.done [#allocation3], 1024
    $region13: #{tpu_custom_call.1} parent=1 // pred_fallthru
      _
    %v28 = vld [vmem:[#allocation2] sm:$0xff]
    %v29 = vld [vmem:[#allocation2 + $0x8] sm:$0xff]
    %v30 = vld [vmem:[#allocation2 + $0x10] sm:$0xff]
    %v31 = vld [vmem:[#allocation2 + $0x18] sm:$0xff]
    %v32 = vld [vmem:[#allocation2 + $0x20] sm:$0xff]
    %v33 = vld [vmem:[#allocation2 + $0x28] sm:$0xff]
    %v34 = vld [vmem:[#allocation2 + $0x30] sm:$0xff]
    %v35 = vld [vmem:[#allocation2 + $0x38] sm:$0xff]
    %v36 = vld [vmem:[%s1] sm:$0xff]
    %v37 = vld [vmem:[%s1 + $0x8] sm:$0xff]
    %v38 = vld [vmem:[%s1 + $0x10] sm:$0xff]
    %v39 = vld [vmem:[%s1 + $0x18] sm:$0xff]
    %v40 = vadd.f32 %v28, %v36
    %v41 = vadd.f32 %v29, %v37
    %v42 = vadd.f32 %v30, %v38
    %v43 = vadd.f32 %v31, %v39
    %v44 = vadd.f32 %v32, %v36
    %v45 = vadd.f32 %v33, %v37
    %v46 = vadd.f32 %v34, %v38
    %v47 = vadd.f32 %v35, %v39
    %48 = vst [vmem:[#allocation5] sm:$0xff] %v40
    %49 = vst [vmem:[#allocation5 + $0x8] sm:$0xff] %v41
    %50 = vst [vmem:[#allocation5 + $0x10] sm:$0xff] %v42
    %51 = vst [vmem:[#allocation5 + $0x18] sm:$0xff] %v43
    %52 = vst [vmem:[#allocation5 + $0x20] sm:$0xff] %v44
    %53 = vst [vmem:[#allocation5 + $0x28] sm:$0xff] %v45
    %54 = vst [vmem:[#allocation5 + $0x30] sm:$0xff] %v46
    %55 = vst [vmem:[#allocation5 + $0x38] sm:$0xff] %v47
    // Predicated region
    $region14: #{tpu_custom_call.1} parent=1 // pred_check
      _
    $region15: #{tpu_custom_call.1} parent=1 // pred_check_branch
      %57 = sbr.rel (0) target = $region17
    $region16: #{tpu_custom_call.1} parent=1 // pred_region
      %59 = vsyncadd [#allocation4], 0
      %s60 = sshll.u32 [#allocation5], 4
      %s61 = int_to_ptr.vmem [resolvable:$true] %s60
      %s62 = sshll.u32 %s2, 4
      %s63 = int_to_ptr.hbm [resolvable:$true] %s62
      %68 = dma.vmem_to_hbm [thread:$0]  %s61, 1024, %s63, [#allocation4], 512, 512, 32
    $region17: #{tpu_custom_call.1} parent=1 // pred_fallthru
      _
    // Predicated region
    $region18: #{tpu_custom_call.1} parent=1 // pred_check
      _
    $region19: #{tpu_custom_call.1} parent=1 // pred_check_branch
      %70 = sbr.rel (0) target = $region21
    $region20: #{tpu_custom_call.1} parent=1 // pred_region
      %72 = dma.done [#allocation4], 1024
    $region21: #{tpu_custom_call.1} parent=1 // pred_fallthru
      _
    %73 = vsyncpa [#allocation3], 1
    %74 = vsyncpa [#allocation4], 1

</llo_original>
